<compile_context>
chip_gen: v5e
topology: v5e:2x2
jax: 0.10.0
libtpu: 0.0.40
codegen_flags: <defaults>
</compile_context>

<pallas_src>
import jax
import jax.numpy as jnp
from jax.experimental import pallas as pl
from jax.experimental.pallas import tpu as pltpu

LANE = 128
SUBLANE = 8


def _round_up(n, m):
    return ((n + m - 1) // m) * m


def _pad2d(a, rows, cols):
    r, c = a.shape
    return jnp.pad(a, ((0, rows - r), (0, cols - c)))


# ---------------------------------------------------------------------------
# Parameter packing: 8 arrays -> one (rows, PW) buffer, row offsets static.
# ---------------------------------------------------------------------------
def pack_params(params, n_input_dims, n_latent_dims, n_units, dtype=jnp.float32):
    """Pack encoder/decoder weights+biases into one lane-padded buffer.

    Row layout (all offsets are multiples of 8):
      w1 : (round_up(D,8), PW)  encoder hidden weight
      b1 : (8, PW)              encoder hidden bias (real row 0)
      w2 : (PW, PW)             encoder output weight
      b2 : (8, PW)
      w3 : (PW, PW)             decoder hidden weight
      b3 : (8, PW)
      w4 : (PW, PW)             decoder output weight
      b4 : (8, PW)
    Zero padding guarantees padded lanes of every activation are tanh(0+0)=0,
    so the whole chain runs lane-dense at width PW.
    `dtype` = jnp.float32 (exact) or jnp.bfloat16 (fast path on v6e/v7x MXU).
    """
    we1, be1, we2, be2, wd1, bd1, wd2, bd2 = params
    D, H, L = n_input_dims, n_units, n_latent_dims
    PW = _round_up(max(D, H, L), LANE)
    Dp = _round_up(D, SUBLANE)

    segs, offs = [], {}

    def add(name, arr, rows):
        offs[name] = sum(s.shape[0] for s in segs)
        segs.append(_pad2d(arr.astype(dtype), rows, PW))

    add("w1", we1, Dp)
    add("b1", be1, SUBLANE)
    add("w2", we2, PW)
    add("b2", be2, SUBLANE)
    add("w3", wd1, PW)
    add("b3", bd1, SUBLANE)
    add("w4", wd2, PW)
    add("b4", bd2, SUBLANE)

    packed = jnp.concatenate(segs, axis=0)
    return packed, offs, PW


# ---------------------------------------------------------------------------
# Fused kernel: encoder (Lin->Tanh->Lin->Tanh) + decoder (Lin->Tanh->Lin->Tanh)
# ---------------------------------------------------------------------------
def _make_kernel(D, PW, offs, compute_dtype):
    ow1, ob1 = offs["w1"], offs["b1"]
    ow2, ob2 = offs["w2"], offs["b2"]
    ow3, ob3 = offs["w3"], offs["b3"]
    ow4, ob4 = offs["w4"], offs["b4"]

    def kernel(x_ref, p_ref, out_ref):
        def layer(a, wo, wrows, bo):
            # MXU matmul with f32 accumulation; bias add in f32; tanh in compute dtype.
            s = jnp.dot(a, p_ref[wo:wo + wrows, :],
                        preferred_element_type=jnp.float32)
            s = s + p_ref[bo:bo + 1, :].astype(jnp.float32)
            return jnp.tanh(s.astype(compute_dtype))

        x = x_ref[...].astype(compute_dtype)          # (TB, D)
        h = layer(x, ow1, D, ob1)                      # encoder hidden
        z = layer(h, ow2, PW, ob2)                     # encoder out (Tanh) = latent
        g = layer(z, ow3, PW, ob3)                     # decoder hidden
        y = layer(g, ow4, PW, ob4)                     # decoder out (Tanh)

        # Lane-dense store: full (TB, PW); the [:, :D] slice happens in the wrapper.
        out_ref[...] = y.astype(out_ref.dtype)

    return kernel


def _pick_tb(B, block_b):
    """Batch tile: >= 2 grid steps whenever B allows it (v7x has 2 TCs),
    capped at block_b to amortize per-step overhead, sublane-aligned."""
    tb = min(block_b, _round_up(pl.cdiv(B, 2), SUBLANE))
    return min(tb, B)


def calf_forward(x, packed, offs, PW, *, block_b=2048):
    """decoder(encoder(x)) as a single fused Pallas kernel.

    x      : (B, D) f32
    packed : packed parameter buffer from pack_params (resident across grid)
    Returns (B, D) f32.
    """
    B, D = x.shape
    compute_dtype = packed.dtype
    TB = _pick_tb(B, block_b)
    grid = (pl.cdiv(B, TB),)

    kernel = _make_kernel(D, PW, offs, compute_dtype)

    # Advisory cost estimate: 4 matmuls of (B, PW) x (PW, PW), 4 tanh over (B, PW).
    cost = pl.CostEstimate(
        flops=8 * B * PW * PW,
        transcendentals=4 * B * PW,
        bytes_accessed=(x.size * x.dtype.itemsize
                        + B * PW * 4
                        + packed.size * packed.dtype.itemsize),
    )

    out_padded = pl.pallas_call(
        kernel,
        out_shape=jax.ShapeDtypeStruct((B, PW), jnp.float32),  # lane-dense output
        grid=grid,
        in_specs=[
            pl.BlockSpec((TB, D), lambda i: (i, 0)),        # x: pipelined over batch
            pl.BlockSpec(packed.shape, lambda i: (0, 0)),   # params: constant -> resident
        ],
        out_specs=pl.BlockSpec((TB, PW), lambda i: (i, 0)),  # lane-dense stores
        compiler_params=pltpu.CompilerParams(
            dimension_semantics=("parallel",),              # megacore / 2-TC split
        ),
        cost_estimate=cost,
    )(x, packed)

    return out_padded[:, :D]


# ---------------------------------------------------------------------------
# Deterministic parameter init (PyTorch Linear-style uniform(+-1/sqrt(fan_in)))
# ---------------------------------------------------------------------------
def init_linear(key, fan_in, fan_out):
    kw, kb = jax.random.split(key)
    bound = 1.0 / jnp.sqrt(fan_in)
    w = jax.random.uniform(kw, (fan_in, fan_out), jnp.float32, -bound, bound)
    b = jax.random.uniform(kb, (1, fan_out), jnp.float32, -bound, bound)
    return w, b


def make_params(key, n_input_dims, n_latent_dims, n_units):
    k = jax.random.split(key, 4)
    we1, be1 = init_linear(k[0], n_input_dims, n_units)    # encoder hidden
    we2, be2 = init_linear(k[1], n_units, n_latent_dims)   # encoder out (Tanh)
    wd1, bd1 = init_linear(k[2], n_latent_dims, n_units)   # decoder hidden
    wd2, bd2 = init_linear(k[3], n_units, n_input_dims)    # decoder out (Tanh)
    return (we1, be1, we2, be2, wd1, bd1, wd2, bd2)


def calf_forward_ref(x, params):
    (we1, be1, we2, be2, wd1, bd1, wd2, bd2) = params
    h = jnp.tanh(x @ we1 + be1)
    z = jnp.tanh(h @ we2 + be2)
    g = jnp.tanh(z @ wd1 + bd1)
    return jnp.tanh(g @ wd2 + bd2)


if __name__ == "__main__":
    # Small shapes consistent with CALFNet: vector observations.
    B = 8
    n_input_dims = 32
    n_latent_dims = 8
    n_units_per_layer = 32
    # n_hidden_layers = 1  (one hidden layer per MLP, as built above)
    # TODO(synk): training-only pieces (GANLoss, discriminator, Adam optimizers,
    # counterfactual shuffling with np.random / torch.multinomial) are not part
    # of forward() and are not implemented here.

    key = jax.random.PRNGKey(0)
    kx, kp = jax.random.split(key)
    x = jax.random.normal(kx, (B, n_input_dims), jnp.float32)
    params = make_params(kp, n_input_dims, n_latent_dims, n_units_per_layer)
    ref = calf_forward_ref(x, params)

    # --- f32 path (default): exact match to the f32 reference at 1e-5 ---
    packed_f32, offs, PW = pack_params(
        params, n_input_dims, n_latent_dims, n_units_per_layer, dtype=jnp.float32)
    out_f32 = jax.block_until_ready(calf_forward(x, packed_f32, offs, PW))
    assert out_f32.shape == (B, n_input_dims)
    assert jnp.allclose(out_f32, ref, atol=1e-5, rtol=1e-5)

    # --- bf16 path (main compute lever on v6e/v7x MXU/EUP); relaxed tolerance ---
    packed_bf16, offs_b, PW_b = pack_params(
        params, n_input_dims, n_latent_dims, n_units_per_layer, dtype=jnp.bfloat16)
    out_bf16 = jax.block_until_ready(calf_forward(x, packed_bf16, offs_b, PW_b))
    assert out_bf16.shape == (B, n_input_dims)
    assert jnp.allclose(out_bf16, ref, atol=5e-2, rtol=5e-2)

    print("KERNEL_OK")
</pallas_src>

<mosaic_0001>
module attributes {stable_mosaic.version = 11 : i64} {
  func.func @kernel(%arg0: i32, %arg1: memref<8x32xf32, #tpu.memory_space<vmem>>, %arg2: memref<448x128xf32, #tpu.memory_space<vmem>>, %arg3: memref<8x128xf32, #tpu.memory_space<vmem>>) attributes {dimension_semantics = [#tpu.dimension_semantics<parallel>], iteration_bounds = array<i64: 1>, scalar_prefetch = 0 : i64, scratch_operands = 0 : i64, tpu.core_type = #tpu.core_type<tc>, window_params = [{transform_indices = @transform_0, window_bounds = array<i64: 8, 32>}, {pipeline_mode = #tpu.pipeline_mode<synchronous>, transform_indices = @transform_1, window_bounds = array<i64: 448, 128>}, {transform_indices = @transform_2, window_bounds = array<i64: 8, 128>}]} {
    %c0 = arith.constant 0 : index
    %c0_0 = arith.constant 0 : index
    %0 = vector.load %arg1[%c0, %c0_0] : memref<8x32xf32, #tpu.memory_space<vmem>>, vector<8x32xf32>
    %c0_1 = arith.constant 0 : index
    %c0_2 = arith.constant 0 : index
    %1 = vector.load %arg2[%c0_1, %c0_2] : memref<448x128xf32, #tpu.memory_space<vmem>>, vector<32x128xf32>
    %cst = arith.constant dense<0.000000e+00> : vector<8x128xf32>
    %2 = tpu.matmul %0, %1, %cst {dimension_numbers = #tpu.dot_dimension_numbers<[1], [0], [0], [1], [0, 0, 1, 1], [], []>} : vector<8x32xf32>, vector<32x128xf32>, vector<8x128xf32> -> vector<8x128xf32>
    %c32 = arith.constant 32 : index
    %c0_3 = arith.constant 0 : index
    %3 = vector.load %arg2[%c32, %c0_3] : memref<448x128xf32, #tpu.memory_space<vmem>>, vector<1x128xf32>
    %4 = vector.broadcast %3 : vector<1x128xf32> to vector<8x128xf32>
    %5 = arith.addf %2, %4 : vector<8x128xf32>
    %6 = math.tanh %5 : vector<8x128xf32>
    %c40 = arith.constant 40 : index
    %c0_4 = arith.constant 0 : index
    %7 = vector.load %arg2[%c40, %c0_4] : memref<448x128xf32, #tpu.memory_space<vmem>>, vector<128x128xf32>
    %cst_5 = arith.constant dense<0.000000e+00> : vector<8x128xf32>
    %8 = tpu.matmul %6, %7, %cst_5 {dimension_numbers = #tpu.dot_dimension_numbers<[1], [0], [0], [1], [0, 0, 1, 1], [], []>} : vector<8x128xf32>, vector<128x128xf32>, vector<8x128xf32> -> vector<8x128xf32>
    %c168 = arith.constant 168 : index
    %c0_6 = arith.constant 0 : index
    %9 = vector.load %arg2[%c168, %c0_6] : memref<448x128xf32, #tpu.memory_space<vmem>>, vector<1x128xf32>
    %10 = vector.broadcast %9 : vector<1x128xf32> to vector<8x128xf32>
    %11 = arith.addf %8, %10 : vector<8x128xf32>
    %12 = math.tanh %11 : vector<8x128xf32>
    %c176 = arith.constant 176 : index
    %c0_7 = arith.constant 0 : index
    %13 = vector.load %arg2[%c176, %c0_7] : memref<448x128xf32, #tpu.memory_space<vmem>>, vector<128x128xf32>
    %cst_8 = arith.constant dense<0.000000e+00> : vector<8x128xf32>
    %14 = tpu.matmul %12, %13, %cst_8 {dimension_numbers = #tpu.dot_dimension_numbers<[1], [0], [0], [1], [0, 0, 1, 1], [], []>} : vector<8x128xf32>, vector<128x128xf32>, vector<8x128xf32> -> vector<8x128xf32>
    %c304 = arith.constant 304 : index
    %c0_9 = arith.constant 0 : index
    %15 = vector.load %arg2[%c304, %c0_9] : memref<448x128xf32, #tpu.memory_space<vmem>>, vector<1x128xf32>
    %16 = vector.broadcast %15 : vector<1x128xf32> to vector<8x128xf32>
    %17 = arith.addf %14, %16 : vector<8x128xf32>
    %18 = math.tanh %17 : vector<8x128xf32>
    %c312 = arith.constant 312 : index
    %c0_10 = arith.constant 0 : index
    %19 = vector.load %arg2[%c312, %c0_10] : memref<448x128xf32, #tpu.memory_space<vmem>>, vector<128x128xf32>
    %cst_11 = arith.constant dense<0.000000e+00> : vector<8x128xf32>
    %20 = tpu.matmul %18, %19, %cst_11 {dimension_numbers = #tpu.dot_dimension_numbers<[1], [0], [0], [1], [0, 0, 1, 1], [], []>} : vector<8x128xf32>, vector<128x128xf32>, vector<8x128xf32> -> vector<8x128xf32>
    %c440 = arith.constant 440 : index
    %c0_12 = arith.constant 0 : index
    %21 = vector.load %arg2[%c440, %c0_12] : memref<448x128xf32, #tpu.memory_space<vmem>>, vector<1x128xf32>
    %22 = vector.broadcast %21 : vector<1x128xf32> to vector<8x128xf32>
    %23 = arith.addf %20, %22 : vector<8x128xf32>
    %24 = math.tanh %23 : vector<8x128xf32>
    %c0_13 = arith.constant 0 : index
    %c0_14 = arith.constant 0 : index
    %25 = vector.load %arg3[%c0_13, %c0_14] : memref<8x128xf32, #tpu.memory_space<vmem>>, vector<8x128xf32>
    tpu.vector_store %arg3[%c0_13, %c0_14], %24 {strides = array<i32>} : memref<8x128xf32, #tpu.memory_space<vmem>>, vector<8x128xf32>,
    return
  }
  func.func @transform_0(%arg0: i32) -> (i32, i32) {
    %c0_i32 = arith.constant 0 : i32
    %c0_i32_0 = arith.constant 0 : i32
    return %arg0, %c0_i32 : i32, i32
  }
  func.func @transform_1(%arg0: i32) -> (i32, i32) {
    %c0_i32 = arith.constant 0 : i32
    %c0_i32_0 = arith.constant 0 : i32
    %c0_i32_1 = arith.constant 0 : i32
    return %c0_i32, %c0_i32_0 : i32, i32
  }
  func.func @transform_2(%arg0: i32) -> (i32, i32) {
    %c0_i32 = arith.constant 0 : i32
    %c0_i32_0 = arith.constant 0 : i32
    return %arg0, %c0_i32 : i32, i32
  }
}

</mosaic_0001>

<llo_original>
// kernel: tpu_custom_call.1
$region0: #{tpu_custom_call.1}
  #allocation0 [shape = 'u32[]', space=smem, size = 0x4, offset = 0x4, fixed_abs, tag = 'smem constant byte address 0x4 - core index']
  #allocation1 [shape = 'u32[72,128]{1,0:T(1,128)}', space=vmem, size = 0x9000, scoped, tag = 'internal scratch']
  %s0 = inlined_call_operand.hbm [shape: f32[8,32], index: 0, kind: input, shape index: {}]
  %s1 = inlined_call_operand.hbm [shape: f32[448,128], index: 1, kind: input, shape index: {}]
  %s2 = inlined_call_operand.hbm [shape: f32[8,128], index: 2, kind: output, shape index: {}]
  %s3 = sld [smem:[#allocation0]]
  $region26: #{tpu_custom_call.1} parent=0
    _
  %s5 = ssub.s32 1, %s3
  %s6 = scalar_select 0, %s5, %s3
  $region1: #{tpu_custom_call.1} parent=0
    #allocation2 [shape = 'u8[4096]{0}', space=vmem, size = 0x1000, scoped, tag = 'input window, operand 0, single buffered']
    #allocation3 [shape = 's32[1]{0}', space=sflag, size = 0x4, scoped, tag = 'scoped memory for tpu_custom_call.1']
    #allocation4 [shape = 's32[1]{0}', space=sflag, size = 0x4, scoped, tag = 'scoped memory for tpu_custom_call.1']
    #allocation5 [shape = 'u8[229376]{0}', space=vmem, size = 0x38000, scoped, tag = 'input window, operand 1, single buffered']
    #allocation6 [shape = 's32[1]{0}', space=sflag, size = 0x4, scoped, tag = 'scoped memory for tpu_custom_call.1']
    #allocation7 [shape = 'u8[4096]{0}', space=vmem, size = 0x1000, scoped, tag = 'output window, operand 0, single buffered']
    %7 = vsyncpa [#allocation3], 0
    %8 = vsyncpa [#allocation6], 0
    %9 = vsyncpa [#allocation4], 0
    // Predicated region
    $region2: #{tpu_custom_call.1} parent=1 // pred_check
      _
    $region3: #{tpu_custom_call.1} parent=1 // pred_check_branch
      %11 = sbr.rel (0) target = $region5
    $region4: #{tpu_custom_call.1} parent=1 // pred_region
      %13 = vsyncadd [#allocation3], 0
      %s15 = sshll.u32 %s0, 4
      %s16 = int_to_ptr.hbm [resolvable:$true] %s15
      %s17 = sshll.u32 [#allocation2], 4
      %s18 = int_to_ptr.vmem [resolvable:$true] %s17
      %20 = dma.hbm_to_vmem [thread:$0]  %s16, 128, %s18, [#allocation3]
    $region5: #{tpu_custom_call.1} parent=1 // pred_fallthru
      _
    // Predicated region
    $region6: #{tpu_custom_call.1} parent=1 // pred_check
      _
    $region7: #{tpu_custom_call.1} parent=1 // pred_check_branch
      %22 = sbr.rel (0) target = $region9
    $region8: #{tpu_custom_call.1} parent=1 // pred_region
      %24 = vsyncadd [#allocation6], 0
      %s25 = sshll.u32 %s1, 4
      %s26 = int_to_ptr.hbm [resolvable:$true] %s25
      %s27 = sshll.u32 [#allocation5], 4
      %s28 = int_to_ptr.vmem [resolvable:$true] %s27
      %33 = dma.hbm_to_vmem [thread:$0]  %s26, 7168, %s28, [#allocation6], 128, 128, 8
    $region9: #{tpu_custom_call.1} parent=1 // pred_fallthru
      _
    // Predicated region
    $region10: #{tpu_custom_call.1} parent=1 // pred_check
      _
    $region11: #{tpu_custom_call.1} parent=1 // pred_check_branch
      %35 = sbr.rel (0) target = $region13
    $region12: #{tpu_custom_call.1} parent=1 // pred_region
      %37 = dma.done [#allocation3], 128
    $region13: #{tpu_custom_call.1} parent=1 // pred_fallthru
      _
    // Predicated region
    $region14: #{tpu_custom_call.1} parent=1 // pred_check
      _
    $region15: #{tpu_custom_call.1} parent=1 // pred_check_branch
      %39 = sbr.rel (0) target = $region17
    $region16: #{tpu_custom_call.1} parent=1 // pred_region
      %41 = dma.done [#allocation6], 7168
    $region17: #{tpu_custom_call.1} parent=1 // pred_fallthru
      _
    %v42 = vld [vmem:[#allocation2] sm:$0xff]
    %v43 = vld [vmem:[#allocation5] sm:$0xff]
    %v44 = vld [vmem:[#allocation5 + $0x8] sm:$0xff]
    %v45 = vld [vmem:[#allocation5 + $0x10] sm:$0xff]
    %v46 = vld [vmem:[#allocation5 + $0x18] sm:$0xff]
    %v47 = vld [vmem:[#allocation5 + $0x20] sm:$0x1]
    %v48 = vperm.slane %v47, 0
    %vm49 = vcmask 261120
    %v51 = vsel %vm49, %v42, 0
    %53 = vmatpush.msra.mxu0 0.0
    %54 = vmatpush.msra.mxu0 0.0
    %55 = vmatpush.msra.mxu0 0.0
    %56 = vmatpush.msra.mxu0 0.0
    %57 = vmatpush.msra.mxu0 0.0
    %58 = vmatpush.msra.mxu0 0.0
    %59 = vmatpush.msra.mxu0 0.0
    %60 = vmatpush.msra.mxu0 0.0
    %61 = vmatpush.msra.mxu0 0.0
    %62 = vmatpush.msra.mxu0 0.0
    %63 = vmatpush.msra.mxu0 0.0
    %64 = vmatpush.msra.mxu0 0.0
    %65 = vmatpush.msra.mxu0 %v46
    %66 = vmatpush.msra.mxu0 %v45
    %67 = vmatpush.msra.mxu0 %v44
    %68 = vmatpush.msra.mxu0 %v43
    %69 = vmatmul.f32.gmra.mxu0 %v51
    %v70 = vpop.f32.mrf.mxu0
    %v71 = vadd.f32 %v48, %v70
    %72 = vdwg.mxu0
    %v73 = vtanh.pop %v71
    %v74 = vld [vmem:[#allocation5 + $0x28] sm:$0xff]
    %v75 = vld [vmem:[#allocation5 + $0x30] sm:$0xff]
    %v76 = vld [vmem:[#allocation5 + $0x38] sm:$0xff]
    %v77 = vld [vmem:[#allocation5 + $0x40] sm:$0xff]
    %v78 = vld [vmem:[#allocation5 + $0x48] sm:$0xff]
    %v79 = vld [vmem:[#allocation5 + $0x50] sm:$0xff]
    %v80 = vld [vmem:[#allocation5 + $0x58] sm:$0xff]
    %v81 = vld [vmem:[#allocation5 + $0x60] sm:$0xff]
    %v82 = vld [vmem:[#allocation5 + $0x68] sm:$0xff]
    %v83 = vld [vmem:[#allocation5 + $0x70] sm:$0xff]
    %v84 = vld [vmem:[#allocation5 + $0x78] sm:$0xff]
    %v85 = vld [vmem:[#allocation5 + $0x80] sm:$0xff]
    %v86 = vld [vmem:[#allocation5 + $0x88] sm:$0xff]
    %v87 = vld [vmem:[#allocation5 + $0x90] sm:$0xff]
    %v88 = vld [vmem:[#allocation5 + $0x98] sm:$0xff]
    %v89 = vld [vmem:[#allocation5 + $0xa0] sm:$0xff]
    %v90 = vld [vmem:[#allocation5 + $0xa8] sm:$0x1]
    %v91 = vperm.slane %v90, 0
    %92 = vmatpush.msra.mxu0 %v89
    %93 = vmatpush.msra.mxu0 %v88
    %94 = vmatpush.msra.mxu0 %v87
    %95 = vmatpush.msra.mxu0 %v86
    %96 = vmatpush.msra.mxu0 %v85
    %97 = vmatpush.msra.mxu0 %v84
    %98 = vmatpush.msra.mxu0 %v83
    %99 = vmatpush.msra.mxu0 %v82
    %100 = vmatpush.msra.mxu0 %v81
    %101 = vmatpush.msra.mxu0 %v80
    %102 = vmatpush.msra.mxu0 %v79
    %103 = vmatpush.msra.mxu0 %v78
    %104 = vmatpush.msra.mxu0 %v77
    %105 = vmatpush.msra.mxu0 %v76
    %106 = vmatpush.msra.mxu0 %v75
    %107 = vmatpush.msra.mxu0 %v74
    %108 = vmatmul.f32.gmra.mxu0 %v73
    %v109 = vpop.f32.mrf.mxu0
    %v110 = vadd.f32 %v91, %v109
    %111 = vdwg.mxu0
    %v112 = vtanh.pop %v110
    %v113 = vld [vmem:[#allocation5 + $0xb0] sm:$0xff]
    %v114 = vld [vmem:[#allocation5 + $0xb8] sm:$0xff]
    %v115 = vld [vmem:[#allocation5 + $0xc0] sm:$0xff]
    %v116 = vld [vmem:[#allocation5 + $0xc8] sm:$0xff]
    %v117 = vld [vmem:[#allocation5 + $0xd0] sm:$0xff]
    %v118 = vld [vmem:[#allocation5 + $0xd8] sm:$0xff]
    %v119 = vld [vmem:[#allocation5 + $0xe0] sm:$0xff]
    %v120 = vld [vmem:[#allocation5 + $0xe8] sm:$0xff]
    %v121 = vld [vmem:[#allocation5 + $0xf0] sm:$0xff]
    %v122 = vld [vmem:[#allocation5 + $0xf8] sm:$0xff]
    %v123 = vld [vmem:[#allocation5 + $0x100] sm:$0xff]
    %v124 = vld [vmem:[#allocation5 + $0x108] sm:$0xff]
    %v125 = vld [vmem:[#allocation5 + $0x110] sm:$0xff]
    %v126 = vld [vmem:[#allocation5 + $0x118] sm:$0xff]
    %v127 = vld [vmem:[#allocation5 + $0x120] sm:$0xff]
    %v128 = vld [vmem:[#allocation5 + $0x128] sm:$0xff]
    %v129 = vld [vmem:[#allocation5 + $0x130] sm:$0x1]
    %v130 = vperm.slane %v129, 0
    %131 = vmatpush.msra.mxu0 %v128
    %132 = vmatpush.msra.mxu0 %v127
    %133 = vmatpush.msra.mxu0 %v126
    %134 = vmatpush.msra.mxu0 %v125
    %135 = vmatpush.msra.mxu0 %v124
    %136 = vmatpush.msra.mxu0 %v123
    %137 = vmatpush.msra.mxu0 %v122
    %138 = vmatpush.msra.mxu0 %v121
    %139 = vmatpush.msra.mxu0 %v120
    %140 = vmatpush.msra.mxu0 %v119
    %141 = vmatpush.msra.mxu0 %v118
    %142 = vmatpush.msra.mxu0 %v117
    %143 = vmatpush.msra.mxu0 %v116
    %144 = vmatpush.msra.mxu0 %v115
    %145 = vmatpush.msra.mxu0 %v114
    %146 = vmatpush.msra.mxu0 %v113
    %147 = vmatmul.f32.gmra.mxu0 %v112
    %v148 = vpop.f32.mrf.mxu0
    %v149 = vadd.f32 %v130, %v148
    %150 = vdwg.mxu0
    %v151 = vtanh.pop %v149
    %v152 = vld [vmem:[#allocation5 + $0x138] sm:$0xff]
    %v153 = vld [vmem:[#allocation5 + $0x140] sm:$0xff]
    %v154 = vld [vmem:[#allocation5 + $0x148] sm:$0xff]
    %v155 = vld [vmem:[#allocation5 + $0x150] sm:$0xff]
    %v156 = vld [vmem:[#allocation5 + $0x158] sm:$0xff]
    %v157 = vld [vmem:[#allocation5 + $0x160] sm:$0xff]
    %v158 = vld [vmem:[#allocation5 + $0x168] sm:$0xff]
    %v159 = vld [vmem:[#allocation5 + $0x170] sm:$0xff]
    %v160 = vld [vmem:[#allocation5 + $0x178] sm:$0xff]
    %v161 = vld [vmem:[#allocation5 + $0x180] sm:$0xff]
    %v162 = vld [vmem:[#allocation5 + $0x188] sm:$0xff]
    %v163 = vld [vmem:[#allocation5 + $0x190] sm:$0xff]
    %v164 = vld [vmem:[#allocation5 + $0x198] sm:$0xff]
    %v165 = vld [vmem:[#allocation5 + $0x1a0] sm:$0xff]
    %v166 = vld [vmem:[#allocation5 + $0x1a8] sm:$0xff]
    %v167 = vld [vmem:[#allocation5 + $0x1b0] sm:$0xff]
    %v168 = vld [vmem:[#allocation5 + $0x1b8] sm:$0x1]
    %v169 = vperm.slane %v168, 0
    %170 = vmatpush.msra.mxu0 %v167
    %171 = vmatpush.msra.mxu0 %v166
    %172 = vmatpush.msra.mxu0 %v165
    %173 = vmatpush.msra.mxu0 %v164
    %174 = vmatpush.msra.mxu0 %v163
    %175 = vmatpush.msra.mxu0 %v162
    %176 = vmatpush.msra.mxu0 %v161
    %177 = vmatpush.msra.mxu0 %v160
    %178 = vmatpush.msra.mxu0 %v159
    %179 = vmatpush.msra.mxu0 %v158
    %180 = vmatpush.msra.mxu0 %v157
    %181 = vmatpush.msra.mxu0 %v156
    %182 = vmatpush.msra.mxu0 %v155
    %183 = vmatpush.msra.mxu0 %v154
    %184 = vmatpush.msra.mxu0 %v153
    %185 = vmatpush.msra.mxu0 %v152
    %186 = vmatmul.f32.gmra.mxu0 %v151
    %v187 = vpop.f32.mrf.mxu0
    %v188 = vadd.f32 %v169, %v187
    %189 = vdwg.mxu0
    %v190 = vtanh.pop %v188
    %191 = vst [vmem:[#allocation7] sm:$0xff] %v190
    // Predicated region
    $region18: #{tpu_custom_call.1} parent=1 // pred_check
      _
    $region19: #{tpu_custom_call.1} parent=1 // pred_check_branch
      %193 = sbr.rel (0) target = $region21
    $region20: #{tpu_custom_call.1} parent=1 // pred_region
      %195 = vsyncadd [#allocation4], 0
      %s197 = sshll.u32 [#allocation7], 4
      %s198 = int_to_ptr.vmem [resolvable:$true] %s197
      %s199 = sshll.u32 %s2, 4
      %s200 = int_to_ptr.hbm [resolvable:$true] %s199
      %202 = dma.vmem_to_hbm [thread:$0]  %s198, 128, %s200, [#allocation4]
    $region21: #{tpu_custom_call.1} parent=1 // pred_fallthru
      _
    // Predicated region
    $region22: #{tpu_custom_call.1} parent=1 // pred_check
      _
    $region23: #{tpu_custom_call.1} parent=1 // pred_check_branch
      %204 = sbr.rel (0) target = $region25
    $region24: #{tpu_custom_call.1} parent=1 // pred_region
      %206 = dma.done [#allocation4], 128
    $region25: #{tpu_custom_call.1} parent=1 // pred_fallthru
      _
    %207 = vsyncpa [#allocation3], 1
    %208 = vsyncpa [#allocation6], 1
    %209 = vsyncpa [#allocation4], 1

</llo_original>
